<compile_context>
chip_gen: v7x
topology: tpu7x:2x2x1
jax: 0.10.0
libtpu: 0.0.40
codegen_flags: <defaults>
</compile_context>

<pallas_src>
import math
import jax
import jax.numpy as jnp
from jax.experimental import pallas as pl
from jax.experimental.pallas import tpu as pltpu


# --------------------------- tiled linear (dense) ----------------------------
def linear_kernel(x_ref, w_ref, b_ref, o_ref, acc_ref):
    # grid = (M//tm, N//tn, K//tk); K axis is the reduction (last, "arbitrary")
    @pl.when(pl.program_id(2) == 0)
    def _():
        acc_ref[...] = jnp.zeros_like(acc_ref)

    acc_ref[...] += jnp.dot(x_ref[...], w_ref[...],
                            preferred_element_type=jnp.float32)

    @pl.when(pl.program_id(2) == pl.num_programs(2) - 1)
    def _():
        o_ref[...] = (acc_ref[...] + b_ref[...].astype(jnp.float32)).astype(o_ref.dtype)


def _pick_tile(dim, candidates):
    """Largest candidate tile that evenly divides `dim`, else the full dim."""
    for c in candidates:
        if dim % c == 0:
            return c
    return dim


def linear(x, w, b):
    """x: (N, Din) ; w: (Din, Dout) ; b: (Dout,) -> (N, Dout)."""
    N, Din = x.shape
    Dout = w.shape[1]
    tm = _pick_tile(N, (256, 128))
    tn = _pick_tile(Dout, (256, 128))
    tk = _pick_tile(Din, (512, 256, 128))
    b2 = b.reshape(1, Dout)
    grid = (N // tm, Dout // tn, Din // tk)
    return pl.pallas_call(
        linear_kernel,
        out_shape=jax.ShapeDtypeStruct((N, Dout), x.dtype),
        grid_spec=pltpu.PrefetchScalarGridSpec(
            num_scalar_prefetch=0,
            grid=grid,
            in_specs=[
                pl.BlockSpec((tm, tk), lambda i, j, k: (i, k)),
                pl.BlockSpec((tk, tn), lambda i, j, k: (k, j)),
                pl.BlockSpec((1, tn), lambda i, j, k: (0, j)),
            ],
            out_specs=pl.BlockSpec((tm, tn), lambda i, j, k: (i, j)),
            scratch_shapes=[pltpu.VMEM((tm, tn), jnp.float32)],
        ),
        compiler_params=pltpu.CompilerParams(
            dimension_semantics=("parallel", "parallel", "arbitrary"),
            vmem_limit_bytes=32 * 1024 * 1024,
        ),
    )(x, w, b2)


# --------------------------- attention core kernel ---------------------------
def _pick_heads_per_block(num_heads, head_dim, sq, sk, itemsize=4,
                          budget_bytes=3 * 1024 * 1024):
    """Heads processed per attention grid step.

    Valid hb: divides num_heads and gives a legal lane block (hb == num_heads,
    i.e. full hidden slab, or hb*head_dim a multiple of 128 lanes).  Among the
    valid choices take the largest whose per-step block set fits a conservative
    VMEM budget (headroom for double buffering on all generations).
    """
    valid = [hb for hb in range(1, num_heads + 1)
             if num_heads % hb == 0
             and (hb == num_heads or (hb * head_dim) % 128 == 0)]
    best = valid[0]
    for hb in valid:
        blk_bytes = (2 * sq * hb * head_dim      # q, out blocks
                     + 2 * sk * hb * head_dim    # k, v blocks
                     + hb * sq * sk) * itemsize  # bias block
        if blk_bytes <= budget_bytes:
            best = hb
    return best


def make_attn_kernel(scale, heads_per_block, head_dim, has_bias):
    d = head_dim

    def _impl(q_ref, k_ref, v_ref, bias_ref, o_ref):
        q = q_ref[0]   # (Sq, Hb*d)
        k = k_ref[0]   # (Sk, Hb*d)
        v = v_ref[0]   # (Sk, Hb*d)
        outs = []
        for h in range(heads_per_block):
            lo = h * d
            qh = q[:, lo:lo + d] * scale          # (Sq, d)
            kh = k[:, lo:lo + d]                  # (Sk, d)
            vh = v[:, lo:lo + d]                  # (Sk, d)
            # scores = (q*scale) @ k^T without materializing k.T (contract d axes)
            s = jax.lax.dot_general(qh, kh, (((1,), (1,)), ((), ())),
                                    preferred_element_type=jnp.float32)  # (Sq, Sk)
            if has_bias:
                s = s + bias_ref[0, h].astype(jnp.float32)
            m = jnp.max(s, axis=-1, keepdims=True)
            p = jnp.exp(s - m)
            l = jnp.sum(p, axis=-1, keepdims=True)
            oh = jnp.dot(p.astype(vh.dtype), vh,
                         preferred_element_type=jnp.float32)             # (Sq, d)
            # deferred normalization: scale the (Sq, d) output, not (Sq, Sk) probs
            oh = oh * pl.reciprocal(l, approx=False)
            outs.append(oh.astype(o_ref.dtype))
        # single lane-dense store of all heads in this block: (Sq, Hb*d)
        o_ref[0] = outs[0] if len(outs) == 1 else jnp.concatenate(outs, axis=-1)

    if has_bias:
        def kernel(q_ref, k_ref, v_ref, bias_ref, o_ref):
            _impl(q_ref, k_ref, v_ref, bias_ref, o_ref)
    else:
        def kernel(q_ref, k_ref, v_ref, o_ref):
            _impl(q_ref, k_ref, v_ref, None, o_ref)
    return kernel


def attention_core(q, k, v, attn_bias, scale, num_heads):
    """q: (B, Sq, hidden) ; k, v: (B, Sk, hidden) ; attn_bias: (B, H, Sq, Sk) or None.

    Returns (B, Sq, hidden) with heads already concatenated along the hidden dim
    (PyTorch x.transpose(1,2).view(B,-1,H*d) layout) — no HBM transposes needed.
    """
    B, Sq, hidden = q.shape
    Sk = k.shape[1]
    d = hidden // num_heads
    hb = _pick_heads_per_block(num_heads, d, Sq, Sk)
    grid = (B, num_heads // hb)

    q_spec = pl.BlockSpec((1, Sq, hb * d), lambda b, h: (b, 0, h))
    kv_spec = pl.BlockSpec((1, Sk, hb * d), lambda b, h: (b, 0, h))
    o_spec = pl.BlockSpec((1, Sq, hb * d), lambda b, h: (b, 0, h))

    in_specs = [q_spec, kv_spec, kv_spec]
    operands = [q, k, v]
    has_bias = attn_bias is not None
    if has_bias:
        in_specs.append(pl.BlockSpec((1, hb, Sq, Sk), lambda b, h: (b, h, 0, 0)))
        operands.append(attn_bias)

    kernel = make_attn_kernel(scale, hb, d, has_bias)
    return pl.pallas_call(
        kernel,
        out_shape=jax.ShapeDtypeStruct((B, Sq, hidden), q.dtype),
        grid=grid,
        in_specs=in_specs,
        out_specs=o_spec,
        compiler_params=pltpu.CompilerParams(
            dimension_semantics=("parallel", "parallel"),
            vmem_limit_bytes=32 * 1024 * 1024,
        ),
    )(*operands)


# ------------------------------- full forward --------------------------------
def _mha_tail(params, q, k, v, attn_bias, scale, num_heads):
    B, Sq, hidden = q.shape
    o = attention_core(q, k, v, attn_bias, scale, num_heads)   # (B, Sq, hidden)
    out = linear(o.reshape(B * Sq, hidden), params["wo"], params["bo"])
    return out.reshape(B, Sq, hidden)


def self_multi_head_attention(params, x, attn_bias, num_heads):
    """Graphormer self-attention path: one fused QKV projection."""
    B, S, hidden = x.shape
    d = hidden // num_heads
    scale = d ** (-0.5)
    qkv = linear(x.reshape(B * S, hidden), params["wqkv"], params["bqkv"])  # (B*S, 3*hidden)
    q = qkv[:, 0 * hidden:1 * hidden].reshape(B, S, hidden)
    k = qkv[:, 1 * hidden:2 * hidden].reshape(B, S, hidden)
    v = qkv[:, 2 * hidden:3 * hidden].reshape(B, S, hidden)
    return _mha_tail(params, q, k, v, attn_bias, scale, num_heads)


def multi_head_attention(params, q_in, k_in, v_in, attn_bias, num_heads):
    """q_in: (B, Sq, hidden) ; k_in/v_in: (B, Sk, hidden) ; attn_bias: (B, H, Sq, Sk) or None."""
    B, Sq, hidden = q_in.shape
    Sk = k_in.shape[1]
    assert hidden % num_heads == 0
    d = hidden // num_heads
    scale = d ** (-0.5)

    if (q_in is k_in) and (k_in is v_in):
        return self_multi_head_attention(params, q_in, attn_bias, num_heads)

    q = linear(q_in.reshape(B * Sq, hidden), params["wq"], params["bq"]).reshape(B, Sq, hidden)
    k = linear(k_in.reshape(B * Sk, hidden), params["wk"], params["bk"]).reshape(B, Sk, hidden)
    v = linear(v_in.reshape(B * Sk, hidden), params["wv"], params["bv"]).reshape(B, Sk, hidden)
    return _mha_tail(params, q, k, v, attn_bias, scale, num_heads)


# ------------------------------ reference (JAX) -------------------------------
def reference_mha(params, q_in, k_in, v_in, attn_bias, num_heads):
    B, Sq, hidden = q_in.shape
    Sk = k_in.shape[1]
    d = hidden // num_heads
    scale = d ** (-0.5)
    q = (q_in @ params["wq"] + params["bq"]).reshape(B, Sq, num_heads, d).transpose(0, 2, 1, 3)
    k = (k_in @ params["wk"] + params["bk"]).reshape(B, Sk, num_heads, d).transpose(0, 2, 1, 3)
    v = (v_in @ params["wv"] + params["bv"]).reshape(B, Sk, num_heads, d).transpose(0, 2, 1, 3)
    s = jnp.einsum("bhqd,bhkd->bhqk", q * scale, k)
    if attn_bias is not None:
        s = s + attn_bias
    p = jax.nn.softmax(s, axis=-1)
    o = jnp.einsum("bhqk,bhkd->bhqd", p, v)
    o = o.transpose(0, 2, 1, 3).reshape(B, Sq, num_heads * d)
    return o @ params["wo"] + params["bo"]


# ------------------------------ param init ------------------------------------
def init_params(key, hidden):
    """nn.Linear default U(-1/sqrt(fan_in), 1/sqrt(fan_in)); also builds fused QKV."""
    bound = 1.0 / math.sqrt(hidden)
    keys = jax.random.split(key, 8)

    def u(k, shape):
        return jax.random.uniform(k, shape, jnp.float32, -bound, bound)

    params = {
        "wq": u(keys[0], (hidden, hidden)), "bq": u(keys[1], (hidden,)),
        "wk": u(keys[2], (hidden, hidden)), "bk": u(keys[3], (hidden,)),
        "wv": u(keys[4], (hidden, hidden)), "bv": u(keys[5], (hidden,)),
        "wo": u(keys[6], (hidden, hidden)), "bo": u(keys[7], (hidden,)),
    }
    params["wqkv"] = jnp.concatenate([params["wq"], params["wk"], params["wv"]], axis=1)
    params["bqkv"] = jnp.concatenate([params["bq"], params["bk"], params["bv"]])
    return params


if __name__ == "__main__":
    B, S, hidden, num_heads = 2, 8, 32, 4

    root = jax.random.PRNGKey(0)
    kp, kx, kb, kk2, kv2 = jax.random.split(root, 5)

    params = init_params(kp, hidden)
    x = jax.random.normal(kx, (B, S, hidden), jnp.float32)
    attn_bias = jax.random.normal(kb, (B, num_heads, S, S), jnp.float32)

    # 1) self-attention (fused QKV projection) with attention bias
    out = multi_head_attention(params, x, x, x, attn_bias, num_heads)
    out = jax.block_until_ready(out)
    ref = reference_mha(params, x, x, x, attn_bias, num_heads)
    assert out.shape == (B, S, hidden)
    assert jnp.allclose(out, ref, atol=1e-4, rtol=1e-4), "self-attention mismatch vs reference"

    # 2) cross-attention (Sq != Sk), no bias -> exercises separate projections
    #    and the bias-free kernel variant (no zero-bias tensor materialized)
    Sk = 16
    k_in = jax.random.normal(kk2, (B, Sk, hidden), jnp.float32)
    v_in = jax.random.normal(kv2, (B, Sk, hidden), jnp.float32)
    out2 = multi_head_attention(params, x, k_in, v_in, None, num_heads)
    out2 = jax.block_until_ready(out2)
    ref2 = reference_mha(params, x, k_in, v_in, None, num_heads)
    assert out2.shape == (B, S, hidden)
    assert jnp.allclose(out2, ref2, atol=1e-4, rtol=1e-4), "cross-attention mismatch vs reference"

    print("KERNEL_OK")
</pallas_src>

<mosaic_0001>
module attributes {stable_mosaic.version = 11 : i64} {
  func.func @linear_kernel(%arg0: i32, %arg1: i32, %arg2: i32, %arg3: memref<16x32xf32, #tpu.memory_space<vmem>>, %arg4: memref<32x96xf32, #tpu.memory_space<vmem>>, %arg5: memref<1x96xf32, #tpu.memory_space<vmem>>, %arg6: memref<16x96xf32, #tpu.memory_space<vmem>>, %arg7: memref<16x96xf32, #tpu.memory_space<vmem>>) attributes {dimension_semantics = [#tpu.dimension_semantics<parallel>, #tpu.dimension_semantics<parallel>, #tpu.dimension_semantics<arbitrary>], iteration_bounds = array<i64: 1, 1, 1>, scalar_prefetch = 0 : i64, scratch_operands = 1 : i64, tpu.core_type = #tpu.core_type<tc>, window_params = [{transform_indices = @transform_0, window_bounds = array<i64: 16, 32>}, {transform_indices = @transform_1, window_bounds = array<i64: 32, 96>}, {transform_indices = @transform_2, window_bounds = array<i64: 1, 96>}, {transform_indices = @transform_3, window_bounds = array<i64: 16, 96>}]} {
    %c0_i32 = arith.constant 0 : i32
    %0 = arith.cmpi eq, %arg2, %c0_i32 : i32
    %1 = arith.extui %0 : i1 to i32
    %c0_i32_0 = arith.constant 0 : i32
    %2 = arith.cmpi ne, %1, %c0_i32_0 : i32
    scf.if %2 {
      %cst_10 = arith.constant 0.000000e+00 : f32
      %12 = vector.broadcast %cst_10 : f32 to vector<16x96xf32>
      %c0_11 = arith.constant 0 : index
      %c0_12 = arith.constant 0 : index
      %13 = vector.load %arg7[%c0_11, %c0_12] : memref<16x96xf32, #tpu.memory_space<vmem>>, vector<16x96xf32>
      tpu.vector_store %arg7[%c0_11, %c0_12], %12 {strides = array<i32>} : memref<16x96xf32, #tpu.memory_space<vmem>>, vector<16x96xf32>,
    } else {
    }
    %c0 = arith.constant 0 : index
    %c0_1 = arith.constant 0 : index
    %3 = vector.load %arg7[%c0, %c0_1] : memref<16x96xf32, #tpu.memory_space<vmem>>, vector<16x96xf32>
    %c0_2 = arith.constant 0 : index
    %c0_3 = arith.constant 0 : index
    %4 = vector.load %arg3[%c0_2, %c0_3] : memref<16x32xf32, #tpu.memory_space<vmem>>, vector<16x32xf32>
    %c0_4 = arith.constant 0 : index
    %c0_5 = arith.constant 0 : index
    %5 = vector.load %arg4[%c0_4, %c0_5] : memref<32x96xf32, #tpu.memory_space<vmem>>, vector<32x96xf32>
    %cst = arith.constant dense<0.000000e+00> : vector<16x96xf32>
    %6 = tpu.matmul %4, %5, %cst {dimension_numbers = #tpu.dot_dimension_numbers<[1], [0], [0], [1], [0, 0, 1, 1], [], []>} : vector<16x32xf32>, vector<32x96xf32>, vector<16x96xf32> -> vector<16x96xf32>
    %7 = arith.addf %3, %6 : vector<16x96xf32>
    %c0_6 = arith.constant 0 : index
    %c0_7 = arith.constant 0 : index
    %8 = vector.load %arg7[%c0_6, %c0_7] : memref<16x96xf32, #tpu.memory_space<vmem>>, vector<16x96xf32>
    tpu.vector_store %arg7[%c0_6, %c0_7], %7 {strides = array<i32>} : memref<16x96xf32, #tpu.memory_space<vmem>>, vector<16x96xf32>,
    %c0_i32_8 = arith.constant 0 : i32
    %9 = arith.cmpi eq, %arg2, %c0_i32_8 : i32
    %10 = arith.extui %9 : i1 to i32
    %c0_i32_9 = arith.constant 0 : i32
    %11 = arith.cmpi ne, %10, %c0_i32_9 : i32
    scf.if %11 {
      %c0_10 = arith.constant 0 : index
      %c0_11 = arith.constant 0 : index
      %12 = vector.load %arg7[%c0_10, %c0_11] : memref<16x96xf32, #tpu.memory_space<vmem>>, vector<16x96xf32>
      %c0_12 = arith.constant 0 : index
      %c0_13 = arith.constant 0 : index
      %13 = vector.load %arg5[%c0_12, %c0_13] : memref<1x96xf32, #tpu.memory_space<vmem>>, vector<1x96xf32>
      %14 = vector.broadcast %13 : vector<1x96xf32> to vector<16x96xf32>
      %15 = arith.addf %12, %14 : vector<16x96xf32>
      %c0_14 = arith.constant 0 : index
      %c0_15 = arith.constant 0 : index
      %16 = vector.load %arg6[%c0_14, %c0_15] : memref<16x96xf32, #tpu.memory_space<vmem>>, vector<16x96xf32>
      tpu.vector_store %arg6[%c0_14, %c0_15], %15 {strides = array<i32>} : memref<16x96xf32, #tpu.memory_space<vmem>>, vector<16x96xf32>,
    } else {
    }
    return
  }
  func.func @transform_0(%arg0: i32, %arg1: i32, %arg2: i32) -> (i32, i32) {
    %c0_i32 = arith.constant 0 : i32
    return %arg0, %arg2 : i32, i32
  }
  func.func @transform_1(%arg0: i32, %arg1: i32, %arg2: i32) -> (i32, i32) {
    %c0_i32 = arith.constant 0 : i32
    return %arg2, %arg1 : i32, i32
  }
  func.func @transform_2(%arg0: i32, %arg1: i32, %arg2: i32) -> (i32, i32) {
    %c0_i32 = arith.constant 0 : i32
    %c0_i32_0 = arith.constant 0 : i32
    return %c0_i32, %arg1 : i32, i32
  }
  func.func @transform_3(%arg0: i32, %arg1: i32, %arg2: i32) -> (i32, i32) {
    %c0_i32 = arith.constant 0 : i32
    return %arg0, %arg1 : i32, i32
  }
}

</mosaic_0001>

<llo_original>
// kernel: tpu_custom_call.1
$region0: #{tpu_custom_call.1}
  #allocation0 [shape = 'u32[]', space=smem, size = 0x4, offset = 0x4, fixed_abs, tag = 'smem constant byte address 0x4 - core index']
  #allocation1 [shape = 'u32[144,128]{1,0:T(1,128)}', space=vmem, size = 0x12000, scoped, tag = 'internal scratch']
  #allocation2 [shape = 'f32[16,96]{1,0:T(8,128)}', space=vmem, size = 0x2000, scoped, tag = 'scratch operand']
  %s0 = inlined_call_operand.hbm [shape: f32[16,32], index: 0, kind: input, shape index: {}]
  %s1 = inlined_call_operand.hbm [shape: f32[32,96], index: 1, kind: input, shape index: {}]
  %s2 = inlined_call_operand.vmem [shape: f32[1,96], index: 2, kind: input, shape index: {}]
  %s3 = inlined_call_operand.hbm [shape: f32[16,96], index: 3, kind: output, shape index: {}]
  %s4 = sld [smem:[#allocation0]]
  $region38: #{tpu_custom_call.1} parent=0
    _
  %s6 = ssub.s32 1, %s4
  %s7 = scalar_select 0, %s6, %s4
  $region1: #{tpu_custom_call.1} parent=0
    #allocation3 [shape = 'u8[8192]{0}', space=vmem, size = 0x2000, scoped, tag = 'input window, operand 0, single buffered']
    #allocation4 [shape = 's32[1]{0}', space=sflag, size = 0x4, scoped, tag = 'scoped memory for tpu_custom_call.1']
    #allocation5 [shape = 's32[1]{0}', space=sflag, size = 0x4, scoped, tag = 'scoped memory for tpu_custom_call.1']
    #allocation6 [shape = 'u8[16384]{0}', space=vmem, size = 0x4000, scoped, tag = 'input window, operand 1, single buffered']
    #allocation7 [shape = 's32[1]{0}', space=sflag, size = 0x4, scoped, tag = 'scoped memory for tpu_custom_call.1']
    #allocation8 [shape = 'u8[8192]{0}', space=vmem, size = 0x2000, scoped, tag = 'output window, operand 0, single buffered']
    %8 = vsyncpa [#allocation4], 0
    %9 = vsyncpa [#allocation7], 0
    %10 = vsyncpa [#allocation5], 0
    // Predicated region
    $region2: #{tpu_custom_call.1} parent=1 // pred_check
      _
    $region3: #{tpu_custom_call.1} parent=1 // pred_check_branch
      %12 = sbr.rel (0) target = $region5
    $region4: #{tpu_custom_call.1} parent=1 // pred_region
      %s14 = ssub.s32 256, 256
      %15 = vsyncadd [#allocation4], %s14
      %s16 = sshll.u32 [#allocation3], 4
      %s17 = int_to_ptr.vmem [resolvable:$true] %s16
      %22 = dma.hbm_to_vmem [thread:$0]  %s0, 256, %s17, [#allocation4], 128, 128, 8
    $region5: #{tpu_custom_call.1} parent=1 // pred_fallthru
      _
    // Predicated region
    $region6: #{tpu_custom_call.1} parent=1 // pred_check
      _
    $region7: #{tpu_custom_call.1} parent=1 // pred_check_branch
      %24 = sbr.rel (0) target = $region9
    $region8: #{tpu_custom_call.1} parent=1 // pred_region
      %s26 = ssub.s32 512, 512
      %27 = vsyncadd [#allocation7], %s26
      %s28 = sshll.u32 [#allocation6], 4
      %s29 = int_to_ptr.vmem [resolvable:$true] %s28
      %34 = dma.hbm_to_vmem [thread:$0]  %s1, 512, %s29, [#allocation7], 128, 128, 8
    $region9: #{tpu_custom_call.1} parent=1 // pred_fallthru
      _
    // Predicated region
    $region10: #{tpu_custom_call.1} parent=1 // pred_check
      _
    $region11: #{tpu_custom_call.1} parent=1 // pred_check_branch
      %36 = sbr.rel (0) target = $region13
    $region12: #{tpu_custom_call.1} parent=1 // pred_region
      _
    $region13: #{tpu_custom_call.1} parent=1 // pred_fallthru
      _
    // Predicated region
    $region14: #{tpu_custom_call.1} parent=1 // pred_check
      _
    $region15: #{tpu_custom_call.1} parent=1 // pred_check_branch
      %38 = sbr.rel (0) target = $region17
    $region16: #{tpu_custom_call.1} parent=1 // pred_region
      %39 = dma.done [#allocation4], 256
    $region17: #{tpu_custom_call.1} parent=1 // pred_fallthru
      _
    // Predicated region
    $region18: #{tpu_custom_call.1} parent=1 // pred_check
      _
    $region19: #{tpu_custom_call.1} parent=1 // pred_check_branch
      %41 = sbr.rel (0) target = $region21
    $region20: #{tpu_custom_call.1} parent=1 // pred_region
      %42 = dma.done [#allocation7], 512
    $region21: #{tpu_custom_call.1} parent=1 // pred_fallthru
      _
    %p43 = scmp.eq.s32.totalorder 0, 0
    // Predicated region
    $region22: #{tpu_custom_call.1} parent=1 // pred_check
      %p44 = pneg %p43
    $region23: #{tpu_custom_call.1} parent=1 // pred_check_branch
      %46 = sbr.rel (%p44) target = $region25
    $region24: #{tpu_custom_call.1} parent=1 // pred_region
      %vm47 = vcmask 785408
      %48 = vst.msk [vmem:[#allocation2] sm:$0xff] %vm47, 0.0
      %49 = vst.msk [vmem:[#allocation2 + $0x8] sm:$0xff] %vm47, 0.0
    $region25: #{tpu_custom_call.1} parent=1 // pred_fallthru
      _
    %v50 = vld [vmem:[#allocation2] sm:$0xff]
    %v51 = vld [vmem:[#allocation2 + $0x8] sm:$0xff]
    %v52 = vld [vmem:[#allocation3] sm:$0xff]
    %v53 = vld [vmem:[#allocation3 + $0x8] sm:$0xff]
    %v54 = vld [vmem:[#allocation6] sm:$0xff]
    %v55 = vld [vmem:[#allocation6 + $0x8] sm:$0xff]
    %v56 = vld [vmem:[#allocation6 + $0x10] sm:$0xff]
    %v57 = vld [vmem:[#allocation6 + $0x18] sm:$0xff]
    %vm58 = vcmask 261120
    %v60 = vsel %vm58, %v52, 0
    %v63 = vsel %vm58, %v53, 0
    %65 = vmatprep.subr.mxu0 0.0
    %66 = vmatpush1.msra.mxu0 %v54
    %67 = vmatprep.subr.mxu0 0.0
    %68 = vmatpush1.msra.mxu0 %v55
    %69 = vmatprep.subr.mxu0 0.0
    %70 = vmatpush1.msra.mxu0 %v56
    %71 = vmatprep.subr.mxu0 0.0
    %72 = vmatpush1.msra.mxu0 %v57
    %73 = vmatprep.subr.mxu0 0.0
    %74 = vmatpush1.msra.mxu0 0.0
    %75 = vmatprep.subr.mxu0 0.0
    %76 = vmatpush1.msra.mxu0 0.0
    %77 = vmatprep.subr.mxu0 0.0
    %78 = vmatpush1.msra.mxu0 0.0
    %79 = vmatprep.subr.mxu0 0.0
    %80 = vmatpush1.msra.mxu0 0.0
    %81 = vmatprep.subr.mxu0 0.0
    %82 = vmatpush1.msra.mxu0 0.0
    %83 = vmatprep.subr.mxu0 0.0
    %84 = vmatpush1.msra.mxu0 0.0
    %85 = vmatprep.subr.mxu0 0.0
    %86 = vmatpush1.msra.mxu0 0.0
    %87 = vmatprep.subr.mxu0 0.0
    %88 = vmatpush1.msra.mxu0 0.0
    %89 = vmatprep.subr.mxu0 0.0
    %90 = vmatpush1.msra.mxu0 0.0
    %91 = vmatprep.subr.mxu0 0.0
    %92 = vmatpush1.msra.mxu0 0.0
    %93 = vmatprep.subr.mxu0 0.0
    %94 = vmatpush1.msra.mxu0 0.0
    %95 = vmatprep.subr.mxu0 0.0
    %96 = vmatpush1.msra.mxu0 0.0
    %97 = vmatprep.subr.mxu0 0.0
    %98 = vmatpush1.msra.mxu0 0.0
    %99 = vmatprep.subr.mxu0 0.0
    %100 = vmatpush1.msra.mxu0 0.0
    %101 = vmatprep.subr.mxu0 0.0
    %102 = vmatpush1.msra.mxu0 0.0
    %103 = vmatprep.subr.mxu0 0.0
    %104 = vmatpush1.msra.mxu0 0.0
    %105 = vmatprep.subr.mxu0 0.0
    %106 = vmatpush1.msra.mxu0 0.0
    %107 = vmatprep.subr.mxu0 0.0
    %108 = vmatpush1.msra.mxu0 0.0
    %109 = vmatprep.subr.mxu0 0.0
    %110 = vmatpush1.msra.mxu0 0.0
    %111 = vmatprep.subr.mxu0 0.0
    %112 = vmatpush1.msra.mxu0 0.0
    %113 = vmatprep.subr.mxu0 0.0
    %114 = vmatpush1.msra.mxu0 0.0
    %115 = vmatprep.subr.mxu0 0.0
    %116 = vmatpush1.msra.mxu0 0.0
    %117 = vmatprep.subr.mxu0 0.0
    %118 = vmatpush1.msra.mxu0 0.0
    %119 = vmatprep.subr.mxu0 0.0
    %120 = vmatpush1.msra.mxu0 0.0
    %121 = vmatprep.subr.mxu0 0.0
    %122 = vmatpush1.msra.mxu0 0.0
    %123 = vmatprep.subr.mxu0 0.0
    %124 = vmatpush1.msra.mxu0 0.0
    %125 = vmatprep.subr.mxu0 0.0
    %126 = vmatpush1.msra.mxu0 0.0
    %127 = vmatprep.subr.mxu0 0.0
    %128 = vmatpush1.msra.mxu0 0.0
    %129 = vmatprep.mubr.f32.mxu0 0.0
    %130 = vmatmul.mubr.f32.gmra.mrb[0].mxu0 %v60
    %v131 = vpop.f32.mrb[0].mxu0
    %v132 = vadd.f32 0.0, %v131
    %v133 = vpop.f32.mrb[0].mxu0
    %134 = vmatprep.mubr.f32.mxu0 0.0
    %135 = vmatmul.mubr.f32.gmra.mrb[0].mxu0 %v63
    %v136 = vpop.f32.mrb[0].mxu0
    %v137 = vadd.f32 0.0, %v136
    %v138 = vpop.f32.mrb[0].mxu0
    %139 = vdwg.mxu0
    %v140 = vadd.f32 %v50, %v132
    %v141 = vadd.f32 %v51, %v137
    %vm142 = vcmask 785408
    %143 = vst.msk [vmem:[#allocation2] sm:$0xff] %vm142, %v140
    %144 = vst.msk [vmem:[#allocation2 + $0x8] sm:$0xff] %vm142, %v141
    // Predicated region
    $region26: #{tpu_custom_call.1} parent=1 // pred_check
      %p145 = pneg %p43
    $region27: #{tpu_custom_call.1} parent=1 // pred_check_branch
      %147 = sbr.rel (%p145) target = $region29
    $region28: #{tpu_custom_call.1} parent=1 // pred_region
      %v148 = vld [vmem:[#allocation2] sm:$0xff]
      %v149 = vld [vmem:[#allocation2 + $0x8] sm:$0xff]
      %v150 = vld [vmem:[%s2] sm:$0x1]
      %v152 = vlaneseq
      %v153 = vshrl.u32 %v152, 7
      %v154 = vsub.s32 0, %v153
      %v155 = vrot.slane %v150, %v154
      %v157 = vadd.f32 %v148, %v155
      %v158 = vadd.f32 %v149, %v155
      %159 = vst.msk [vmem:[#allocation8] sm:$0xff] %vm142, %v157
      %160 = vst.msk [vmem:[#allocation8 + $0x8] sm:$0xff] %vm142, %v158
    $region29: #{tpu_custom_call.1} parent=1 // pred_fallthru
      _
    // Predicated region
    $region30: #{tpu_custom_call.1} parent=1 // pred_check
      _
    $region31: #{tpu_custom_call.1} parent=1 // pred_check_branch
      %162 = sbr.rel (0) target = $region33
    $region32: #{tpu_custom_call.1} parent=1 // pred_region
      %s164 = ssub.s32 256, 256
      %165 = vsyncadd [#allocation5], %s164
      %s166 = sshll.u32 [#allocation8], 4
      %s167 = int_to_ptr.vmem [resolvable:$true] %s166
      %172 = dma.vmem_to_hbm [thread:$0]  %s167, 256, %s3, [#allocation5], 128, 128, 8
    $region33: #{tpu_custom_call.1} parent=1 // pred_fallthru
      _
    // Predicated region
    $region34: #{tpu_custom_call.1} parent=1 // pred_check
      _
    $region35: #{tpu_custom_call.1} parent=1 // pred_check_branch
      %174 = sbr.rel (0) target = $region37
    $region36: #{tpu_custom_call.1} parent=1 // pred_region
      %175 = dma.done [#allocation5], 256
    $region37: #{tpu_custom_call.1} parent=1 // pred_fallthru
      _
    %176 = vsyncpa [#allocation4], 1
    %177 = vsyncpa [#allocation7], 1
    %178 = vsyncpa [#allocation5], 1

</llo_original>
